<compile_context>
chip_gen: v7x
topology: tpu7x:2x2x1
jax: 0.10.0
libtpu: 0.0.40
codegen_flags: <defaults>
</compile_context>

<pallas_src>
import math

import jax
import jax.numpy as jnp
from jax import lax
from jax.experimental import pallas as pl
from jax.experimental.pallas import tpu as pltpu

_NEG_INF = -1e30


def _make_attn_kernel(n_head, head_size, t_blk, compute_dtype):
    C = n_head * head_size

    def kernel(xq_ref, xkv_ref, wq_ref, bq_ref, wkv_ref, bkv_ref, o_ref,
               q_sc, m_sc, l_sc, acc_sc):
        qi = pl.program_id(1)
        ki = pl.program_id(2)

        # ---- once per (batch, q-tile): project Q (scale pre-folded), reset state
        @pl.when(ki == 0)
        def _init():
            q_sc[...] = (jnp.dot(xq_ref[0], wq_ref[...],
                                 preferred_element_type=jnp.float32)
                         + bq_ref[...])                                  # (tb, C) f32
            m_sc[...] = jnp.full(m_sc.shape, _NEG_INF, jnp.float32)
            l_sc[...] = jnp.zeros(l_sc.shape, jnp.float32)
            acc_sc[...] = jnp.zeros(acc_sc.shape, jnp.float32)

        # ---- flash step; kv tiles strictly above the causal diagonal are skipped
        @pl.when(ki <= qi)
        def _step():
            kv = (jnp.dot(xkv_ref[0], wkv_ref[...],
                          preferred_element_type=jnp.float32)
                  + bkv_ref[...])                                        # (tb, 2C) f32

            row = qi * t_blk + lax.broadcasted_iota(jnp.int32, (t_blk, t_blk), 0)
            col = ki * t_blk + lax.broadcasted_iota(jnp.int32, (t_blk, t_blk), 1)
            bias = jnp.where(row >= col, 0.0, _NEG_INF)                  # additive mask

            for h in range(n_head):                                      # static unroll
                q_h = q_sc[:, h * head_size:(h + 1) * head_size].astype(compute_dtype)
                k_h = kv[:, h * head_size:(h + 1) * head_size].astype(compute_dtype)
                v_h = kv[:, C + h * head_size:C + (h + 1) * head_size]

                s = lax.dot_general(q_h, k_h, (((1,), (1,)), ((), ())),
                                    preferred_element_type=jnp.float32) + bias
                m_prev = m_sc[h]                                         # (tb, 1)
                m_new = jnp.maximum(m_prev, jnp.max(s, axis=-1, keepdims=True))
                alpha = jnp.exp(m_prev - m_new)
                p = jnp.exp(s - m_new)                                   # f32 on EUP
                l_sc[h] = alpha * l_sc[h] + jnp.sum(p, axis=-1, keepdims=True)
                acc_sc[h] = alpha * acc_sc[h] + jnp.dot(
                    p.astype(compute_dtype), v_h.astype(compute_dtype),
                    preferred_element_type=jnp.float32)
                m_sc[h] = m_new

        # ---- diagonal block is the last contributing kv tile: normalize & store
        @pl.when(ki == qi)
        def _finalize():
            inv_l = pl.reciprocal(l_sc[...], approx=False)               # (nh, tb, 1)
            heads = [acc_sc[h] * inv_l[h] for h in range(n_head)]        # (tb, hs) each
            o_ref[0] = jnp.concatenate(heads, axis=-1).astype(o_ref.dtype)

    return kernel


def self_attention_head(x, W, b, n_head, *, block_t=128,
                        compute_dtype=jnp.float32):
    """Pallas forward of SelfAttentionHead.

    x : (B, T, C) activations.
    W : (3C, C)   weight of nn.Linear(C, 3C) (PyTorch out_features x in_features).
    b : (3C,)     bias of that Linear.
    The causal 'tril' buffer is not needed: the mask is generated in-kernel
    (equivalent to tril[:T, :T]).
    compute_dtype: dtype fed to the MXU. jnp.bfloat16 is recommended on
    v6e/v7x for ~4x matmul throughput (accumulation stays float32); the
    default stays float32 to match the PyTorch reference to 1e-5.
    """
    B, T, C = x.shape
    assert C % n_head == 0, "n_embd must be divisible by n_head"
    hs = C // n_head
    scale = hs ** -0.5

    tb = min(block_t, T)
    assert T % tb == 0, "T must be divisible by the tile size"
    n_blk = T // tb

    # PyTorch Linear computes x @ W.T + b; output channels are ordered
    # [q | k | v] x [head] x [head_size] (matches the .view in the module).
    Wt = W.T                                            # (C, 3C)
    wq = (Wt[:, :C] * scale).astype(compute_dtype)      # scale folded into Wq
    bq = (b[:C] * scale).astype(jnp.float32).reshape(1, C)
    wkv = Wt[:, C:].astype(compute_dtype)               # (C, 2C)
    bkv = b[C:].astype(jnp.float32).reshape(1, 2 * C)
    xc = x.astype(compute_dtype)

    kernel = _make_attn_kernel(n_head, hs, tb, compute_dtype)

    return pl.pallas_call(
        kernel,
        out_shape=jax.ShapeDtypeStruct((B, T, C), x.dtype),
        grid_spec=pltpu.PrefetchScalarGridSpec(
            num_scalar_prefetch=0,
            grid=(B, n_blk, n_blk),                     # (batch, q-tile, kv-tile)
            in_specs=[
                # x for the query rows: block index constant over ki -> DMA'd once.
                pl.BlockSpec((1, tb, C), lambda bi, qi, ki: (bi, qi, 0)),
                # x for the key/value rows: clamp to the diagonal so masked-out
                # kv tiles are never fetched.
                pl.BlockSpec((1, tb, C),
                             lambda bi, qi, ki: (bi, jnp.minimum(ki, qi), 0)),
                pl.BlockSpec((C, C), lambda bi, qi, ki: (0, 0)),          # Wq (scaled)
                pl.BlockSpec((1, C), lambda bi, qi, ki: (0, 0)),          # bq (scaled)
                pl.BlockSpec((C, 2 * C), lambda bi, qi, ki: (0, 0)),      # Wkv
                pl.BlockSpec((1, 2 * C), lambda bi, qi, ki: (0, 0)),      # bkv
            ],
            out_specs=pl.BlockSpec((1, tb, C), lambda bi, qi, ki: (bi, qi, 0)),
            scratch_shapes=[
                pltpu.VMEM((tb, C), jnp.float32),            # projected Q (all heads)
                pltpu.VMEM((n_head, tb, 1), jnp.float32),    # running max m
                pltpu.VMEM((n_head, tb, 1), jnp.float32),    # running sum l
                pltpu.VMEM((n_head, tb, hs), jnp.float32),   # un-normalized acc
            ],
        ),
        compiler_params=pltpu.CompilerParams(
            dimension_semantics=("parallel", "parallel", "arbitrary")),
    )(xc, xc, wq, bq, wkv, bkv)


def _reference(x, W, b, tril, n_head):
    """Pure-JAX reference mirroring the PyTorch forward, for verification."""
    B, T, C = x.shape
    hs = C // n_head
    qkv = x @ W.T + b                               # (B, T, 3C)
    qkv = qkv.reshape(B, T, 3, n_head, hs)
    q = jnp.transpose(qkv[:, :, 0], (0, 2, 1, 3))   # (B, nh, T, hs)
    k = jnp.transpose(qkv[:, :, 1], (0, 2, 1, 3))
    v = jnp.transpose(qkv[:, :, 2], (0, 2, 1, 3))
    wei = jnp.einsum("bhqd,bhkd->bhqk", q, k) * hs ** -0.5
    wei = jnp.where(tril[:T, :T] == 0.0, -jnp.inf, wei)
    wei = jax.nn.softmax(wei, axis=-1)
    out = jnp.einsum("bhqk,bhkd->bhqd", wei, v)
    return jnp.transpose(out, (0, 2, 1, 3)).reshape(B, T, C)


if __name__ == "__main__":
    # Small deterministic config.
    B, T = 2, 8
    n_embd, block_size, n_head = 32, 16, 2

    key = jax.random.PRNGKey(0)
    kx, kw, kb = jax.random.split(key, 3)

    x = jax.random.normal(kx, (B, T, n_embd), dtype=jnp.float32)
    # nn.Linear(n_embd, 3*n_embd): weight (3C, C), bias (3C,)
    bound = 1.0 / math.sqrt(n_embd)
    W = jax.random.uniform(kw, (3 * n_embd, n_embd), jnp.float32, -bound, bound)
    b = jax.random.uniform(kb, (3 * n_embd,), jnp.float32, -bound, bound)
    tril = jnp.tril(jnp.ones((block_size, block_size), dtype=jnp.float32))

    out = self_attention_head(x, W, b, n_head)
    out = jax.block_until_ready(out)

    ref = _reference(x, W, b, tril, n_head)
    assert out.shape == (B, T, n_embd)
    assert jnp.allclose(out, ref, atol=1e-5, rtol=1e-5), "mismatch vs reference"

    print("KERNEL_OK")
</pallas_src>

<mosaic_0001>
module attributes {stable_mosaic.version = 11 : i64} {
  func.func @kernel(%arg0: i32, %arg1: i32, %arg2: i32, %arg3: memref<1x8x32xf32, #tpu.memory_space<vmem>>, %arg4: memref<1x8x32xf32, #tpu.memory_space<vmem>>, %arg5: memref<32x32xf32, #tpu.memory_space<vmem>>, %arg6: memref<1x32xf32, #tpu.memory_space<vmem>>, %arg7: memref<32x64xf32, #tpu.memory_space<vmem>>, %arg8: memref<1x64xf32, #tpu.memory_space<vmem>>, %arg9: memref<1x8x32xf32, #tpu.memory_space<vmem>>, %arg10: memref<8x32xf32, #tpu.memory_space<vmem>>, %arg11: memref<2x8x1xf32, #tpu.memory_space<vmem>>, %arg12: memref<2x8x1xf32, #tpu.memory_space<vmem>>, %arg13: memref<2x8x16xf32, #tpu.memory_space<vmem>>) attributes {dimension_semantics = [#tpu.dimension_semantics<parallel>, #tpu.dimension_semantics<parallel>, #tpu.dimension_semantics<arbitrary>], iteration_bounds = array<i64: 2, 1, 1>, scalar_prefetch = 0 : i64, scratch_operands = 4 : i64, tpu.core_type = #tpu.core_type<tc>, window_params = [{transform_indices = @transform_0, window_bounds = array<i64: 1, 8, 32>}, {transform_indices = @transform_1, window_bounds = array<i64: 1, 8, 32>}, {pipeline_mode = #tpu.pipeline_mode<synchronous>, transform_indices = @transform_2, window_bounds = array<i64: 32, 32>}, {pipeline_mode = #tpu.pipeline_mode<synchronous>, transform_indices = @transform_3, window_bounds = array<i64: 1, 32>}, {pipeline_mode = #tpu.pipeline_mode<synchronous>, transform_indices = @transform_4, window_bounds = array<i64: 32, 64>}, {pipeline_mode = #tpu.pipeline_mode<synchronous>, transform_indices = @transform_5, window_bounds = array<i64: 1, 64>}, {transform_indices = @transform_6, window_bounds = array<i64: 1, 8, 32>}]} {
    %c0_i32 = arith.constant 0 : i32
    %0 = arith.cmpi eq, %arg2, %c0_i32 : i32
    %1 = arith.extui %0 : i1 to i32
    %c0_i32_0 = arith.constant 0 : i32
    %2 = arith.cmpi ne, %1, %c0_i32_0 : i32
    scf.if %2 {
      %c0 = arith.constant 0 : index
      %c0_3 = arith.constant 0 : index
      %c0_4 = arith.constant 0 : index
      %9 = vector.load %arg3[%c0, %c0_3, %c0_4] : memref<1x8x32xf32, #tpu.memory_space<vmem>>, vector<1x8x32xf32>
      %10 = vector.shape_cast %9 : vector<1x8x32xf32> to vector<8x32xf32>
      %c0_5 = arith.constant 0 : index
      %c0_6 = arith.constant 0 : index
      %11 = vector.load %arg5[%c0_5, %c0_6] : memref<32x32xf32, #tpu.memory_space<vmem>>, vector<32x32xf32>
      %cst = arith.constant dense<0.000000e+00> : vector<8x32xf32>
      %12 = tpu.matmul %10, %11, %cst {dimension_numbers = #tpu.dot_dimension_numbers<[1], [0], [0], [1], [0, 0, 1, 1], [], []>} : vector<8x32xf32>, vector<32x32xf32>, vector<8x32xf32> -> vector<8x32xf32>
      %c0_7 = arith.constant 0 : index
      %c0_8 = arith.constant 0 : index
      %13 = vector.load %arg6[%c0_7, %c0_8] : memref<1x32xf32, #tpu.memory_space<vmem>>, vector<1x32xf32>
      %14 = vector.broadcast %13 : vector<1x32xf32> to vector<8x32xf32>
      %15 = arith.addf %12, %14 : vector<8x32xf32>
      %c0_9 = arith.constant 0 : index
      %c0_10 = arith.constant 0 : index
      %16 = vector.load %arg10[%c0_9, %c0_10] : memref<8x32xf32, #tpu.memory_space<vmem>>, vector<8x32xf32>
      tpu.vector_store %arg10[%c0_9, %c0_10], %15 {strides = array<i32>} : memref<8x32xf32, #tpu.memory_space<vmem>>, vector<8x32xf32>,
      %cst_11 = arith.constant -1.000000e+30 : f32
      %17 = vector.broadcast %cst_11 : f32 to vector<2x8x1xf32>
      %c0_12 = arith.constant 0 : index
      %c0_13 = arith.constant 0 : index
      %c0_14 = arith.constant 0 : index
      %18 = vector.load %arg11[%c0_12, %c0_13, %c0_14] : memref<2x8x1xf32, #tpu.memory_space<vmem>>, vector<2x8x1xf32>
      tpu.vector_store %arg11[%c0_12, %c0_13, %c0_14], %17 {strides = array<i32>} : memref<2x8x1xf32, #tpu.memory_space<vmem>>, vector<2x8x1xf32>,
      %cst_15 = arith.constant 0.000000e+00 : f32
      %19 = vector.broadcast %cst_15 : f32 to vector<2x8x1xf32>
      %c0_16 = arith.constant 0 : index
      %c0_17 = arith.constant 0 : index
      %c0_18 = arith.constant 0 : index
      %20 = vector.load %arg12[%c0_16, %c0_17, %c0_18] : memref<2x8x1xf32, #tpu.memory_space<vmem>>, vector<2x8x1xf32>
      tpu.vector_store %arg12[%c0_16, %c0_17, %c0_18], %19 {strides = array<i32>} : memref<2x8x1xf32, #tpu.memory_space<vmem>>, vector<2x8x1xf32>,
      %cst_19 = arith.constant 0.000000e+00 : f32
      %21 = vector.broadcast %cst_19 : f32 to vector<2x8x16xf32>
      %c0_20 = arith.constant 0 : index
      %c0_21 = arith.constant 0 : index
      %c0_22 = arith.constant 0 : index
      %22 = vector.load %arg13[%c0_20, %c0_21, %c0_22] : memref<2x8x16xf32, #tpu.memory_space<vmem>>, vector<2x8x16xf32>
      tpu.vector_store %arg13[%c0_20, %c0_21, %c0_22], %21 {strides = array<i32>} : memref<2x8x16xf32, #tpu.memory_space<vmem>>, vector<2x8x16xf32>,
    } else {
    }
    %3 = arith.cmpi sle, %arg2, %arg1 : i32
    %4 = arith.extui %3 : i1 to i32
    %c0_i32_1 = arith.constant 0 : i32
    %5 = arith.cmpi ne, %4, %c0_i32_1 : i32
    scf.if %5 {
      %c0 = arith.constant 0 : index
      %c0_3 = arith.constant 0 : index
      %c0_4 = arith.constant 0 : index
      %9 = vector.load %arg4[%c0, %c0_3, %c0_4] : memref<1x8x32xf32, #tpu.memory_space<vmem>>, vector<1x8x32xf32>
      %10 = vector.shape_cast %9 : vector<1x8x32xf32> to vector<8x32xf32>
      %c0_5 = arith.constant 0 : index
      %c0_6 = arith.constant 0 : index
      %11 = vector.load %arg7[%c0_5, %c0_6] : memref<32x64xf32, #tpu.memory_space<vmem>>, vector<32x64xf32>
      %cst = arith.constant dense<0.000000e+00> : vector<8x64xf32>
      %12 = tpu.matmul %10, %11, %cst {dimension_numbers = #tpu.dot_dimension_numbers<[1], [0], [0], [1], [0, 0, 1, 1], [], []>} : vector<8x32xf32>, vector<32x64xf32>, vector<8x64xf32> -> vector<8x64xf32>
      %c0_7 = arith.constant 0 : index
      %c0_8 = arith.constant 0 : index
      %13 = vector.load %arg8[%c0_7, %c0_8] : memref<1x64xf32, #tpu.memory_space<vmem>>, vector<1x64xf32>
      %14 = vector.broadcast %13 : vector<1x64xf32> to vector<8x64xf32>
      %15 = arith.addf %12, %14 : vector<8x64xf32>
      %c8_i32 = arith.constant 8 : i32
      %16 = arith.muli %arg1, %c8_i32 : i32
      %17 = tpu.iota {dimensions = array<i32: 0>} : vector<8x8xi32>
      %18 = vector.broadcast %16 : i32 to vector<8x8xi32>
      %19 = arith.addi %18, %17 : vector<8x8xi32>
      %c8_i32_9 = arith.constant 8 : i32
      %20 = arith.muli %arg2, %c8_i32_9 : i32
      %21 = tpu.iota {dimensions = array<i32: 1>} : vector<8x8xi32>
      %22 = vector.broadcast %20 : i32 to vector<8x8xi32>
      %23 = arith.addi %22, %21 : vector<8x8xi32>
      %24 = arith.cmpi sge, %19, %23 : vector<8x8xi32>
      %cst_10 = arith.constant 0.000000e+00 : f32
      %cst_11 = arith.constant -1.000000e+30 : f32
      %25 = vector.broadcast %cst_10 : f32 to vector<8x8xf32>
      %26 = vector.broadcast %cst_11 : f32 to vector<8x8xf32>
      %27 = arith.select %24, %25, %26 : vector<8x8xi1>, vector<8x8xf32>
      %c0_12 = arith.constant 0 : index
      %c0_13 = arith.constant 0 : index
      %28 = vector.load %arg10[%c0_12, %c0_13] : memref<8x32xf32, #tpu.memory_space<vmem>>, vector<8x16xf32>
      %29 = vector.extract_strided_slice %15 {offsets = [0, 0], sizes = [8, 16], strides = [1, 1]} : vector<8x64xf32> to vector<8x16xf32>
      %30 = vector.extract_strided_slice %15 {offsets = [0, 32], sizes = [8, 16], strides = [1, 1]} : vector<8x64xf32> to vector<8x16xf32>
      %cst_14 = arith.constant dense<0.000000e+00> : vector<8x8xf32>
      %31 = tpu.matmul %28, %29, %cst_14 {dimension_numbers = #tpu.dot_dimension_numbers<[1], [1], [0], [0], [0, 0, 1, 0], [], []>} : vector<8x16xf32>, vector<8x16xf32>, vector<8x8xf32> -> vector<8x8xf32>
      %32 = arith.addf %31, %27 : vector<8x8xf32>
      %c0_15 = arith.constant 0 : index
      %c0_16 = arith.constant 0 : index
      %c0_17 = arith.constant 0 : index
      %33 = vector.load %arg11[%c0_15, %c0_16, %c0_17] : memref<2x8x1xf32, #tpu.memory_space<vmem>>, vector<1x8x1xf32>
      %34 = vector.shape_cast %33 : vector<1x8x1xf32> to vector<8x1xf32>
      %cst_18 = arith.constant dense<0xFF800000> : vector<8xf32>
      %35 = vector.multi_reduction <maximumf>, %32, %cst_18 [1] : vector<8x8xf32> to vector<8xf32>
      %36 = vector.shape_cast %35 : vector<8xf32> to vector<8x1xf32>
      %37 = arith.maximumf %34, %36 : vector<8x1xf32>
      %38 = arith.subf %34, %37 : vector<8x1xf32>
      %39 = math.exp %38 : vector<8x1xf32>
      %40 = vector.broadcast %37 : vector<8x1xf32> to vector<8x8xf32>
      %41 = arith.subf %32, %40 : vector<8x8xf32>
      %42 = math.exp %41 : vector<8x8xf32>
      %c0_19 = arith.constant 0 : index
      %c0_20 = arith.constant 0 : index
      %c0_21 = arith.constant 0 : index
      %43 = vector.load %arg12[%c0_19, %c0_20, %c0_21] : memref<2x8x1xf32, #tpu.memory_space<vmem>>, vector<1x8x1xf32>
      %44 = vector.shape_cast %43 : vector<1x8x1xf32> to vector<8x1xf32>
      %45 = arith.mulf %39, %44 : vector<8x1xf32>
      %cst_22 = arith.constant dense<0.000000e+00> : vector<8xf32>
      %46 = vector.multi_reduction <add>, %42, %cst_22 [1] : vector<8x8xf32> to vector<8xf32>
      %47 = vector.shape_cast %46 : vector<8xf32> to vector<8x1xf32>
      %48 = arith.addf %45, %47 : vector<8x1xf32>
      %c0_23 = arith.constant 0 : index
      %c0_24 = arith.constant 0 : index
      %c0_25 = arith.constant 0 : index
      %49 = vector.load %arg12[%c0_23, %c0_24, %c0_25] : memref<2x8x1xf32, #tpu.memory_space<vmem>>, vector<1x8x1xf32>
      %50 = vector.shape_cast %49 : vector<1x8x1xf32> to vector<8x1xf32>
      %51 = vector.shape_cast %48 : vector<8x1xf32> to vector<1x8x1xf32>
      tpu.vector_store %arg12[%c0_23, %c0_24, %c0_25], %51 {strides = array<i32>} : memref<2x8x1xf32, #tpu.memory_space<vmem>>, vector<1x8x1xf32>,
      %c0_26 = arith.constant 0 : index
      %c0_27 = arith.constant 0 : index
      %c0_28 = arith.constant 0 : index
      %52 = vector.load %arg13[%c0_26, %c0_27, %c0_28] : memref<2x8x16xf32, #tpu.memory_space<vmem>>, vector<1x8x16xf32>
      %53 = vector.shape_cast %52 : vector<1x8x16xf32> to vector<8x16xf32>
      %54 = vector.broadcast %39 : vector<8x1xf32> to vector<8x16xf32>
      %55 = arith.mulf %54, %53 : vector<8x16xf32>
      %cst_29 = arith.constant dense<0.000000e+00> : vector<8x16xf32>
      %56 = tpu.matmul %42, %30, %cst_29 {dimension_numbers = #tpu.dot_dimension_numbers<[1], [0], [0], [1], [0, 0, 1, 1], [], []>} : vector<8x8xf32>, vector<8x16xf32>, vector<8x16xf32> -> vector<8x16xf32>
      %57 = arith.addf %55, %56 : vector<8x16xf32>
      %c0_30 = arith.constant 0 : index
      %c0_31 = arith.constant 0 : index
      %c0_32 = arith.constant 0 : index
      %58 = vector.load %arg13[%c0_30, %c0_31, %c0_32] : memref<2x8x16xf32, #tpu.memory_space<vmem>>, vector<1x8x16xf32>
      %59 = vector.shape_cast %58 : vector<1x8x16xf32> to vector<8x16xf32>
      %60 = vector.shape_cast %57 : vector<8x16xf32> to vector<1x8x16xf32>
      tpu.vector_store %arg13[%c0_30, %c0_31, %c0_32], %60 {strides = array<i32>} : memref<2x8x16xf32, #tpu.memory_space<vmem>>, vector<1x8x16xf32>,
      %c0_33 = arith.constant 0 : index
      %c0_34 = arith.constant 0 : index
      %c0_35 = arith.constant 0 : index
      %61 = vector.load %arg11[%c0_33, %c0_34, %c0_35] : memref<2x8x1xf32, #tpu.memory_space<vmem>>, vector<1x8x1xf32>
      %62 = vector.shape_cast %61 : vector<1x8x1xf32> to vector<8x1xf32>
      %63 = vector.shape_cast %37 : vector<8x1xf32> to vector<1x8x1xf32>
      tpu.vector_store %arg11[%c0_33, %c0_34, %c0_35], %63 {strides = array<i32>} : memref<2x8x1xf32, #tpu.memory_space<vmem>>, vector<1x8x1xf32>,
      %c0_36 = arith.constant 0 : index
      %c16 = arith.constant 16 : index
      %64 = vector.load %arg10[%c0_36, %c16] : memref<8x32xf32, #tpu.memory_space<vmem>>, vector<8x16xf32>
      %65 = vector.extract_strided_slice %15 {offsets = [0, 16], sizes = [8, 16], strides = [1, 1]} : vector<8x64xf32> to vector<8x16xf32>
      %66 = vector.extract_strided_slice %15 {offsets = [0, 48], sizes = [8, 16], strides = [1, 1]} : vector<8x64xf32> to vector<8x16xf32>
      %cst_37 = arith.constant dense<0.000000e+00> : vector<8x8xf32>
      %67 = tpu.matmul %64, %65, %cst_37 {dimension_numbers = #tpu.dot_dimension_numbers<[1], [1], [0], [0], [0, 0, 1, 0], [], []>} : vector<8x16xf32>, vector<8x16xf32>, vector<8x8xf32> -> vector<8x8xf32>
      %68 = arith.addf %67, %27 : vector<8x8xf32>
      %c1 = arith.constant 1 : index
      %c0_38 = arith.constant 0 : index
      %c0_39 = arith.constant 0 : index
      %69 = vector.load %arg11[%c1, %c0_38, %c0_39] : memref<2x8x1xf32, #tpu.memory_space<vmem>>, vector<1x8x1xf32>
      %70 = vector.shape_cast %69 : vector<1x8x1xf32> to vector<8x1xf32>
      %cst_40 = arith.constant dense<0xFF800000> : vector<8xf32>
      %71 = vector.multi_reduction <maximumf>, %68, %cst_40 [1] : vector<8x8xf32> to vector<8xf32>
      %72 = vector.shape_cast %71 : vector<8xf32> to vector<8x1xf32>
      %73 = arith.maximumf %70, %72 : vector<8x1xf32>
      %74 = arith.subf %70, %73 : vector<8x1xf32>
      %75 = math.exp %74 : vector<8x1xf32>
      %76 = vector.broadcast %73 : vector<8x1xf32> to vector<8x8xf32>
      %77 = arith.subf %68, %76 : vector<8x8xf32>
      %78 = math.exp %77 : vector<8x8xf32>
      %c1_41 = arith.constant 1 : index
      %c0_42 = arith.constant 0 : index
      %c0_43 = arith.constant 0 : index
      %79 = vector.load %arg12[%c1_41, %c0_42, %c0_43] : memref<2x8x1xf32, #tpu.memory_space<vmem>>, vector<1x8x1xf32>
      %80 = vector.shape_cast %79 : vector<1x8x1xf32> to vector<8x1xf32>
      %81 = arith.mulf %75, %80 : vector<8x1xf32>
      %cst_44 = arith.constant dense<0.000000e+00> : vector<8xf32>
      %82 = vector.multi_reduction <add>, %78, %cst_44 [1] : vector<8x8xf32> to vector<8xf32>
      %83 = vector.shape_cast %82 : vector<8xf32> to vector<8x1xf32>
      %84 = arith.addf %81, %83 : vector<8x1xf32>
      %c1_45 = arith.constant 1 : index
      %c0_46 = arith.constant 0 : index
      %c0_47 = arith.constant 0 : index
      %85 = vector.load %arg12[%c1_45, %c0_46, %c0_47] : memref<2x8x1xf32, #tpu.memory_space<vmem>>, vector<1x8x1xf32>
      %86 = vector.shape_cast %85 : vector<1x8x1xf32> to vector<8x1xf32>
      %87 = vector.shape_cast %84 : vector<8x1xf32> to vector<1x8x1xf32>
      tpu.vector_store %arg12[%c1_45, %c0_46, %c0_47], %87 {strides = array<i32>} : memref<2x8x1xf32, #tpu.memory_space<vmem>>, vector<1x8x1xf32>,
      %c1_48 = arith.constant 1 : index
      %c0_49 = arith.constant 0 : index
      %c0_50 = arith.constant 0 : index
      %88 = vector.load %arg13[%c1_48, %c0_49, %c0_50] : memref<2x8x16xf32, #tpu.memory_space<vmem>>, vector<1x8x16xf32>
      %89 = vector.shape_cast %88 : vector<1x8x16xf32> to vector<8x16xf32>
      %90 = vector.broadcast %75 : vector<8x1xf32> to vector<8x16xf32>
      %91 = arith.mulf %90, %89 : vector<8x16xf32>
      %cst_51 = arith.constant dense<0.000000e+00> : vector<8x16xf32>
      %92 = tpu.matmul %78, %66, %cst_51 {dimension_numbers = #tpu.dot_dimension_numbers<[1], [0], [0], [1], [0, 0, 1, 1], [], []>} : vector<8x8xf32>, vector<8x16xf32>, vector<8x16xf32> -> vector<8x16xf32>
      %93 = arith.addf %91, %92 : vector<8x16xf32>
      %c1_52 = arith.constant 1 : index
      %c0_53 = arith.constant 0 : index
      %c0_54 = arith.constant 0 : index
      %94 = vector.load %arg13[%c1_52, %c0_53, %c0_54] : memref<2x8x16xf32, #tpu.memory_space<vmem>>, vector<1x8x16xf32>
      %95 = vector.shape_cast %94 : vector<1x8x16xf32> to vector<8x16xf32>
      %96 = vector.shape_cast %93 : vector<8x16xf32> to vector<1x8x16xf32>
      tpu.vector_store %arg13[%c1_52, %c0_53, %c0_54], %96 {strides = array<i32>} : memref<2x8x16xf32, #tpu.memory_space<vmem>>, vector<1x8x16xf32>,
      %c1_55 = arith.constant 1 : index
      %c0_56 = arith.constant 0 : index
      %c0_57 = arith.constant 0 : index
      %97 = vector.load %arg11[%c1_55, %c0_56, %c0_57] : memref<2x8x1xf32, #tpu.memory_space<vmem>>, vector<1x8x1xf32>
      %98 = vector.shape_cast %97 : vector<1x8x1xf32> to vector<8x1xf32>
      %99 = vector.shape_cast %73 : vector<8x1xf32> to vector<1x8x1xf32>
      tpu.vector_store %arg11[%c1_55, %c0_56, %c0_57], %99 {strides = array<i32>} : memref<2x8x1xf32, #tpu.memory_space<vmem>>, vector<1x8x1xf32>,
    } else {
    }
    %6 = arith.cmpi eq, %arg2, %arg1 : i32
    %7 = arith.extui %6 : i1 to i32
    %c0_i32_2 = arith.constant 0 : i32
    %8 = arith.cmpi ne, %7, %c0_i32_2 : i32
    scf.if %8 {
      %c0 = arith.constant 0 : index
      %c0_3 = arith.constant 0 : index
      %c0_4 = arith.constant 0 : index
      %9 = vector.load %arg12[%c0, %c0_3, %c0_4] : memref<2x8x1xf32, #tpu.memory_space<vmem>>, vector<2x8x1xf32>
      %10 = tpu.reciprocal %9 : vector<2x8x1xf32> -> vector<2x8x1xf32>
      %c0_5 = arith.constant 0 : index
      %c0_6 = arith.constant 0 : index
      %c0_7 = arith.constant 0 : index
      %11 = vector.load %arg13[%c0_5, %c0_6, %c0_7] : memref<2x8x16xf32, #tpu.memory_space<vmem>>, vector<1x8x16xf32>
      %12 = vector.shape_cast %11 : vector<1x8x16xf32> to vector<8x16xf32>
      %13 = vector.extract_strided_slice %10 {offsets = [0, 0, 0], sizes = [1, 8, 1], strides = [1, 1, 1]} : vector<2x8x1xf32> to vector<1x8x1xf32>
      %14 = vector.shape_cast %13 : vector<1x8x1xf32> to vector<8x1xf32>
      %15 = vector.broadcast %14 : vector<8x1xf32> to vector<8x16xf32>
      %16 = arith.mulf %12, %15 : vector<8x16xf32>
      %c1 = arith.constant 1 : index
      %c0_8 = arith.constant 0 : index
      %c0_9 = arith.constant 0 : index
      %17 = vector.load %arg13[%c1, %c0_8, %c0_9] : memref<2x8x16xf32, #tpu.memory_space<vmem>>, vector<1x8x16xf32>
      %18 = vector.shape_cast %17 : vector<1x8x16xf32> to vector<8x16xf32>
      %19 = vector.extract_strided_slice %10 {offsets = [1, 0, 0], sizes = [1, 8, 1], strides = [1, 1, 1]} : vector<2x8x1xf32> to vector<1x8x1xf32>
      %20 = vector.shape_cast %19 : vector<1x8x1xf32> to vector<8x1xf32>
      %21 = vector.broadcast %20 : vector<8x1xf32> to vector<8x16xf32>
      %22 = arith.mulf %18, %21 : vector<8x16xf32>
      %23 = tpu.concatenate %16, %22 in 1 : vector<8x16xf32>, vector<8x16xf32> -> vector<8x32xf32>
      %c0_10 = arith.constant 0 : index
      %c0_11 = arith.constant 0 : index
      %c0_12 = arith.constant 0 : index
      %24 = vector.load %arg9[%c0_10, %c0_11, %c0_12] : memref<1x8x32xf32, #tpu.memory_space<vmem>>, vector<1x8x32xf32>
      %25 = vector.shape_cast %24 : vector<1x8x32xf32> to vector<8x32xf32>
      %26 = vector.shape_cast %23 : vector<8x32xf32> to vector<1x8x32xf32>
      tpu.vector_store %arg9[%c0_10, %c0_11, %c0_12], %26 {strides = array<i32>} : memref<1x8x32xf32, #tpu.memory_space<vmem>>, vector<1x8x32xf32>,
    } else {
    }
    return
  }
  func.func @transform_0(%arg0: i32, %arg1: i32, %arg2: i32) -> (i32, i32, i32) {
    %c0_i32 = arith.constant 0 : i32
    %c0_i32_0 = arith.constant 0 : i32
    return %arg0, %arg1, %c0_i32 : i32, i32, i32
  }
  func.func @transform_1(%arg0: i32, %arg1: i32, %arg2: i32) -> (i32, i32, i32) {
    %0 = arith.minsi %arg2, %arg1 : i32
    %c0_i32 = arith.constant 0 : i32
    %c0_i32_0 = arith.constant 0 : i32
    return %arg0, %0, %c0_i32 : i32, i32, i32
  }
  func.func @transform_2(%arg0: i32, %arg1: i32, %arg2: i32) -> (i32, i32) {
    %c0_i32 = arith.constant 0 : i32
    %c0_i32_0 = arith.constant 0 : i32
    %c0_i32_1 = arith.constant 0 : i32
    return %c0_i32, %c0_i32_0 : i32, i32
  }
  func.func @transform_3(%arg0: i32, %arg1: i32, %arg2: i32) -> (i32, i32) {
    %c0_i32 = arith.constant 0 : i32
    %c0_i32_0 = arith.constant 0 : i32
    %c0_i32_1 = arith.constant 0 : i32
    return %c0_i32, %c0_i32_0 : i32, i32
  }
  func.func @transform_4(%arg0: i32, %arg1: i32, %arg2: i32) -> (i32, i32) {
    %c0_i32 = arith.constant 0 : i32
    %c0_i32_0 = arith.constant 0 : i32
    %c0_i32_1 = arith.constant 0 : i32
    return %c0_i32, %c0_i32_0 : i32, i32
  }
  func.func @transform_5(%arg0: i32, %arg1: i32, %arg2: i32) -> (i32, i32) {
    %c0_i32 = arith.constant 0 : i32
    %c0_i32_0 = arith.constant 0 : i32
    %c0_i32_1 = arith.constant 0 : i32
    return %c0_i32, %c0_i32_0 : i32, i32
  }
  func.func @transform_6(%arg0: i32, %arg1: i32, %arg2: i32) -> (i32, i32, i32) {
    %c0_i32 = arith.constant 0 : i32
    %c0_i32_0 = arith.constant 0 : i32
    return %arg0, %arg1, %c0_i32 : i32, i32, i32
  }
}

</mosaic_0001>

<llo_original>
// kernel: tpu_custom_call.1
$region0: #{tpu_custom_call.1}
  #allocation0 [shape = 'u32[]', space=smem, size = 0x4, offset = 0x4, fixed_abs, tag = 'smem constant byte address 0x4 - core index']
  #allocation1 [shape = 'u32[144,128]{1,0:T(1,128)}', space=vmem, size = 0x12000, scoped, tag = 'internal scratch']
  #allocation2 [shape = 'f32[8,32]{1,0:T(8,128)}', space=vmem, size = 0x1000, scoped, tag = 'scratch operand']
  #allocation3 [shape = 'f32[2,8,1]{2,1,0:T(8,128)}', space=vmem, size = 0x2000, scoped, tag = 'scratch operand']
  #allocation4 [shape = 'f32[2,8,1]{2,1,0:T(8,128)}', space=vmem, size = 0x2000, scoped, tag = 'scratch operand']
  #allocation5 [shape = 'f32[2,8,16]{2,1,0:T(8,128)}', space=vmem, size = 0x2000, scoped, tag = 'scratch operand']
  %s0 = inlined_call_operand.hbm [shape: f32[2,8,32], index: 0, kind: input, shape index: {}]
  %s1 = inlined_call_operand.hbm [shape: f32[2,8,32], index: 1, kind: input, shape index: {}]
  %s2 = inlined_call_operand.hbm [shape: f32[32,32], index: 2, kind: input, shape index: {}]
  %s3 = inlined_call_operand.vmem [shape: f32[1,32], index: 3, kind: input, shape index: {}]
  %s4 = inlined_call_operand.hbm [shape: f32[32,64], index: 4, kind: input, shape index: {}]
  %s5 = inlined_call_operand.vmem [shape: f32[1,64], index: 5, kind: input, shape index: {}]
  %s6 = inlined_call_operand.hbm [shape: f32[2,8,32], index: 6, kind: output, shape index: {}]
  %s7 = sld [smem:[#allocation0]]
  $region85: #{tpu_custom_call.1} parent=0
    _
  %s9 = ssub.s32 1, %s7
  %s10 = scalar_select 0, %s9, %s7
  $region1: #{tpu_custom_call.1} parent=0
    #allocation6 [shape = 'u8[8192]{0}', space=vmem, size = 0x2000, scoped, tag = 'input window, operand 0']
    #allocation7 [shape = 's32[2]{0}', space=sflag, size = 0x8, scoped, tag = 'scoped memory for tpu_custom_call.1']
    #allocation8 [shape = 's32[2]{0}', space=sflag, size = 0x8, scoped, tag = 'scoped memory for tpu_custom_call.1']
    #allocation9 [shape = 'u8[8192]{0}', space=vmem, size = 0x2000, scoped, tag = 'input window, operand 1']
    #allocation10 [shape = 's32[2]{0}', space=sflag, size = 0x8, scoped, tag = 'scoped memory for tpu_custom_call.1']
    #allocation11 [shape = 'u8[16384]{0}', space=vmem, size = 0x4000, scoped, tag = 'input window, operand 2, single buffered']
    #allocation12 [shape = 'u8[16384]{0}', space=vmem, size = 0x4000, scoped, tag = 'input window, operand 4, single buffered']
    #allocation13 [shape = 's32[1]{0}', space=sflag, size = 0x4, scoped, tag = 'scoped memory for tpu_custom_call.1']
    #allocation14 [shape = 'u8[8192]{0}', space=vmem, size = 0x2000, scoped, tag = 'output window, operand 0']
    %11 = vsyncpa [#allocation7], 0
    %s12 = scalar_lea.sflag [#allocation7], 1
    %13 = vsyncpa %s12, 0
    %14 = vsyncpa [#allocation10], 0
    %s15 = scalar_lea.sflag [#allocation10], 1
    %16 = vsyncpa %s15, 0
    %17 = vsyncpa [#allocation13], 0
    %18 = vsyncpa [#allocation8], 0
    %s19 = scalar_lea.sflag [#allocation8], 1
    %20 = vsyncpa %s19, 0
    loop: start=0, step=1, limit=4
    $region2: #{tpu_custom_call.1} parent=1 // loop_pre_header
      _
    $region3: #{tpu_custom_call.1} parent=1 // loop_header
      %s22 = sphi 0, %s26
      %p23 = scmp.ge.s32.totalorder %s22, 4
      %s29 = sphi 0, %s48
      %s30 = sphi 0, %s44
      %s31 = sphi 0, %s40
      %s32 = sphi 0, %s29
      %s33 = sphi 0, %s30
      %s34 = sphi 0, %s31
      %s35 = sphi 0, %s32
      %s36 = sphi 0, %s33
      %s37 = sphi 0, %s34
      %s53 = sphi 0, %s55
      %s56 = sphi 0, %s53
      %s57 = sphi 0, %s56
      %s73 = sphi 0, %s57
      %s85 = sphi 0, %s87
      %s88 = sphi 0, %s85
      %s89 = sphi 0, %s88
      %s105 = sphi 0, %s89
      %s109 = sphi 0, %s109
      %s111 = sphi 0, %s109
      %s112 = sphi 0, %s111
      %s126 = sphi 0, %s112
      %s130 = sphi 0, %s130
      %s132 = sphi 0, %s130
      %s133 = sphi 0, %s132
      %s147 = sphi 0, %s133
      %s151 = sphi 0, %s151
      %s153 = sphi 0, %s151
      %s154 = sphi 0, %s153
      %s168 = sphi 0, %s154
      %s172 = sphi 0, %s172
      %s174 = sphi 0, %s172
      %s175 = sphi 0, %s174
      %s189 = sphi 0, %s175
      %s197 = sphi 0, %s199
      %s200 = sphi 0, %s197
      %s201 = sphi 0, %s200
      %s217 = sphi 0, %s201
    $region4: #{tpu_custom_call.1} parent=1 // loop_header_branch
      %25 = sbr.rel (%p23) target = $region8
    $region5: #{tpu_custom_call.1} parent=1 // loop_body
      %s27 = ssub.s32 %s22, 1
      %s28 = ssub.s32 %s22, 2
      %s38 = sadd.s32 1, %s31
      %p39 = scmp.ge.s32.totalorder %s38, 1
      %s40 = scalar_select %p39, 0, %s38
      %s41 = sadd.s32 1, %s30
      %s42 = scalar_select %p39, %s41, %s30
      %p43 = scmp.ge.s32.totalorder %s42, 1
      %s44 = scalar_select %p43, 0, %s42
      %s45 = sadd.s32 1, %s29
      %s46 = scalar_select %p43, %s45, %s29
      %p47 = scmp.ge.s32.totalorder %s46, 2
      %s48 = scalar_select %p47, 0, %s46
      %s49 = ssub.s32 %s29, %s48
      %s50 = ssub.s32 %s30, %s44
      %s51 = sor.u32 %s49, %s50
      %p52 = scmp.eq.s32.totalorder %s51, 0
      %s54 = sadd.s32 %s53, 1
      %s55 = scalar_select %p52, %s53, %s54
      %p58 = pneg %p52
      %p59 = scmp.eq.s32.totalorder %s22, 1
      %p60 = por %p58, %p59
      %p61 = scmp.ne.s32.totalorder %s53, %s56
      %p62 = scmp.eq.s32.totalorder %s22, 0
      %p63 = por %p61, %p62
      %p64 = scmp.ne.s32.totalorder %s53, %s56
      %p65 = scmp.eq.s32.totalorder %s27, 1
      %p66 = por %p64, %p65
      %p67 = scmp.ne.s32.totalorder %s56, %s57
      %p68 = scmp.eq.s32.totalorder %s27, 0
      %p69 = por %p67, %p68
      %p70 = scmp.ne.s32.totalorder %s56, %s57
      %p71 = scmp.eq.s32.totalorder %s28, 1
      %p72 = por %p70, %p71
      %p74 = scmp.ne.s32.totalorder %s57, %s73
      %p75 = scmp.eq.s32.totalorder %s28, 0
      %p76 = por %p74, %p75
      %p77 = scmp.lt.s32.totalorder %s31, %s30
      %s78 = scalar_select %p77, %s31, %s30
      %p79 = scmp.lt.s32.totalorder %s40, %s44
      %s80 = scalar_select %p79, %s40, %s44
      %s81 = ssub.s32 %s29, %s48
      %s82 = ssub.s32 %s78, %s80
      %s83 = sor.u32 %s81, %s82
      %p84 = scmp.eq.s32.totalorder %s83, 0
      %s86 = sadd.s32 %s85, 1
      %s87 = scalar_select %p84, %s85, %s86
      %p90 = pneg %p84
      %p91 = scmp.eq.s32.totalorder %s22, 1
      %p92 = por %p90, %p91
      %p93 = scmp.ne.s32.totalorder %s85, %s88
      %p94 = scmp.eq.s32.totalorder %s22, 0
      %p95 = por %p93, %p94
      %p96 = scmp.ne.s32.totalorder %s85, %s88
      %p97 = scmp.eq.s32.totalorder %s27, 1
      %p98 = por %p96, %p97
      %p99 = scmp.ne.s32.totalorder %s88, %s89
      %p100 = scmp.eq.s32.totalorder %s27, 0
      %p101 = por %p99, %p100
      %p102 = scmp.ne.s32.totalorder %s88, %s89
      %p103 = scmp.eq.s32.totalorder %s28, 1
      %p104 = por %p102, %p103
      %p106 = scmp.ne.s32.totalorder %s89, %s105
      %p107 = scmp.eq.s32.totalorder %s28, 0
      %p108 = por %p106, %p107
      %s110 = sadd.s32 %s109, 1
      %p113 = scmp.eq.s32.totalorder %s22, 1
      %p114 = scmp.ne.s32.totalorder %s109, %s111
      %p115 = scmp.eq.s32.totalorder %s22, 0
      %p116 = por %p114, %p115
      %p117 = scmp.ne.s32.totalorder %s109, %s111
      %p118 = scmp.eq.s32.totalorder %s27, 1
      %p119 = por %p117, %p118
      %p120 = scmp.ne.s32.totalorder %s111, %s112
      %p121 = scmp.eq.s32.totalorder %s27, 0
      %p122 = por %p120, %p121
      %p123 = scmp.ne.s32.totalorder %s111, %s112
      %p124 = scmp.eq.s32.totalorder %s28, 1
      %p125 = por %p123, %p124
      %p127 = scmp.ne.s32.totalorder %s112, %s126
      %p128 = scmp.eq.s32.totalorder %s28, 0
      %p129 = por %p127, %p128
      %s131 = sadd.s32 %s130, 1
      %p134 = scmp.eq.s32.totalorder %s22, 1
      %p135 = scmp.ne.s32.totalorder %s130, %s132
      %p136 = scmp.eq.s32.totalorder %s22, 0
      %p137 = por %p135, %p136
      %p138 = scmp.ne.s32.totalorder %s130, %s132
      %p139 = scmp.eq.s32.totalorder %s27, 1
      %p140 = por %p138, %p139
      %p141 = scmp.ne.s32.totalorder %s132, %s133
      %p142 = scmp.eq.s32.totalorder %s27, 0
      %p143 = por %p141, %p142
      %p144 = scmp.ne.s32.totalorder %s132, %s133
      %p145 = scmp.eq.s32.totalorder %s28, 1
      %p146 = por %p144, %p145
      %p148 = scmp.ne.s32.totalorder %s133, %s147
      %p149 = scmp.eq.s32.totalorder %s28, 0
      %p150 = por %p148, %p149
      %s152 = sadd.s32 %s151, 1
      %p155 = scmp.eq.s32.totalorder %s22, 1
      %p156 = scmp.ne.s32.totalorder %s151, %s153
      %p157 = scmp.eq.s32.totalorder %s22, 0
      %p158 = por %p156, %p157
      %p159 = scmp.ne.s32.totalorder %s151, %s153
      %p160 = scmp.eq.s32.totalorder %s27, 1
      %p161 = por %p159, %p160
      %p162 = scmp.ne.s32.totalorder %s153, %s154
      %p163 = scmp.eq.s32.totalorder %s27, 0
      %p164 = por %p162, %p163
      %p165 = scmp.ne.s32.totalorder %s153, %s154
      %p166 = scmp.eq.s32.totalorder %s28, 1
      %p167 = por %p165, %p166
      %p169 = scmp.ne.s32.totalorder %s154, %s168
      %p170 = scmp.eq.s32.totalorder %s28, 0
      %p171 = por %p169, %p170
      %s173 = sadd.s32 %s172, 1
      %p176 = scmp.eq.s32.totalorder %s22, 1
      %p177 = scmp.ne.s32.totalorder %s172, %s174
      %p178 = scmp.eq.s32.totalorder %s22, 0
      %p179 = por %p177, %p178
      %p180 = scmp.ne.s32.totalorder %s172, %s174
      %p181 = scmp.eq.s32.totalorder %s27, 1
      %p182 = por %p180, %p181
      %p183 = scmp.ne.s32.totalorder %s174, %s175
      %p184 = scmp.eq.s32.totalorder %s27, 0
      %p185 = por %p183, %p184
      %p186 = scmp.ne.s32.totalorder %s174, %s175
      %p187 = scmp.eq.s32.totalorder %s28, 1
      %p188 = por %p186, %p187
      %p190 = scmp.ne.s32.totalorder %s175, %s189
      %p191 = scmp.eq.s32.totalorder %s28, 0
      %p192 = por %p190, %p191
      %s193 = ssub.s32 %s29, %s48
      %s194 = ssub.s32 %s30, %s44
      %s195 = sor.u32 %s193, %s194
      %p196 = scmp.eq.s32.totalorder %s195, 0
      %s198 = sadd.s32 %s197, 1
      %s199 = scalar_select %p196, %s197, %s198
      %p202 = pneg %p196
      %p203 = scmp.eq.s32.totalorder %s22, 1
      %p204 = por %p202, %p203
      %p205 = scmp.ne.s32.totalorder %s197, %s200
      %p206 = scmp.eq.s32.totalorder %s22, 0
      %p207 = por %p205, %p206
      %p208 = scmp.ne.s32.totalorder %s197, %s200
      %p209 = scmp.eq.s32.totalorder %s27, 1
      %p210 = por %p208, %p209
      %p211 = scmp.ne.s32.totalorder %s200, %s201
      %p212 = scmp.eq.s32.totalorder %s27, 0
      %p213 = por %p211, %p212
      %p214 = scmp.ne.s32.totalorder %s200, %s201
      %p215 = scmp.eq.s32.totalorder %s28, 1
      %p216 = por %p214, %p215
      %p218 = scmp.ne.s32.totalorder %s201, %s217
      %p219 = scmp.eq.s32.totalorder %s28, 0
      %p220 = por %p218, %p219
      %p221 = scmp.le.s32.totalorder 1, %s22
      %p222 = scmp.lt.s32.totalorder %s22, 3
      %p223 = pnand %p221, %p222
      %p224 = pneg %p223
      // Predicated region
      $region9: #{tpu_custom_call.1} parent=5 // pred_check
        _
      $region10: #{tpu_custom_call.1} parent=5 // pred_check_branch
        %226 = sbr.rel (%p223) target = $region12
      $region11: #{tpu_custom_call.1} parent=5 // pred_region
        %s227 = ssub.s32 %s22, 1
        // Predicated region
        $region13: #{tpu_custom_call.1} parent=11 // pred_check
          %p228 = pneg %p122
        $region14: #{tpu_custom_call.1} parent=11 // pred_check_branch
          %230 = sbr.rel (%p228) target = $region16
        $region15: #{tpu_custom_call.1} parent=11 // pred_region
          %s232 = ssub.s32 512, 512
          %233 = vsyncadd [#allocation10], %s232
          %s234 = sshll.u32 [#allocation11], 4
          %s235 = int_to_ptr.vmem [resolvable:$true] %s234
          %240 = dma.hbm_to_vmem [thread:$0]  %s2, 512, %s235, [#allocation10], 128, 128, 8
        $region16: #{tpu_custom_call.1} parent=11 // pred_fallthru
          _
        // Predicated region
        $region17: #{tpu_custom_call.1} parent=11 // pred_check
          %p241 = pneg %p143
        $region18: #{tpu_custom_call.1} parent=11 // pred_check_branch
          %243 = sbr.rel (%p241) target = $region20
        $region19: #{tpu_custom_call.1} parent=11 // pred_region
          _
        $region20: #{tpu_custom_call.1} parent=11 // pred_fallthru
          _
        // Predicated region
        $region21: #{tpu_custom_call.1} parent=11 // pred_check
          %p244 = pneg %p164
        $region22: #{tpu_custom_call.1} parent=11 // pred_check_branch
          %246 = sbr.rel (%p244) target = $region24
        $region23: #{tpu_custom_call.1} parent=11 // pred_region
          %s248 = ssub.s32 512, 512
          %249 = vsyncadd [#allocation13], %s248
          %s250 = sshll.u32 [#allocation12], 4
          %s251 = int_to_ptr.vmem [resolvable:$true] %s250
          %256 = dma.hbm_to_vmem [thread:$0]  %s4, 512, %s251, [#allocation13], 128, 128, 8
        $region24: #{tpu_custom_call.1} parent=11 // pred_fallthru
          _
        // Predicated region
        $region25: #{tpu_custom_call.1} parent=11 // pred_check
          %p257 = pneg %p185
        $region26: #{tpu_custom_call.1} parent=11 // pred_check_branch
          %259 = sbr.rel (%p257) target = $region28
        $region27: #{tpu_custom_call.1} parent=11 // pred_region
          _
        $region28: #{tpu_custom_call.1} parent=11 // pred_fallthru
          _
      $region12: #{tpu_custom_call.1} parent=5 // pred_fallthru
        _
      %p260 = scmp.lt.s32.totalorder %s22, 2
      // Predicated region
      $region29: #{tpu_custom_call.1} parent=5 // pred_check
        %p261 = pneg %p260
      $region30: #{tpu_custom_call.1} parent=5 // pred_check_branch
        %263 = sbr.rel (%p261) target = $region32
      $region31: #{tpu_custom_call.1} parent=5 // pred_region
        // Predicated region
        $region33: #{tpu_custom_call.1} parent=31 // pred_check
          %p264 = pneg %p63
        $region34: #{tpu_custom_call.1} parent=31 // pred_check_branch
          %266 = sbr.rel (%p264) target = $region36
        $region35: #{tpu_custom_call.1} parent=31 // pred_region
          %s267 = sand.u32 %s53, 1
          %s268 = scalar_lea.sflag [#allocation7], %s267
          %s269 = sand.u32 %s53, 1
          %s270 = smul.addr %s269, 8
          %s271 = scalar_lea.vmem [#allocation6], %s270
          %s273 = ssub.s32 128, 128
          %274 = vsyncadd %s268, %s273
          %s275 = sadd.s32 %s30, %s29
          %s276 = smul.addr %s275, 128
          %s277 = scalar_lea.hbm %s0, %s276
          %s279 = sshll.u32 %s271, 4
          %s280 = int_to_ptr.vmem [resolvable:$true] %s279
          %282 = dma.hbm_to_vmem [thread:$0]  %s277, 128, %s280, %s268
        $region36: #{tpu_custom_call.1} parent=31 // pred_fallthru
          _
        // Predicated region
        $region37: #{tpu_custom_call.1} parent=31 // pred_check
          %p283 = pneg %p95
        $region38: #{tpu_custom_call.1} parent=31 // pred_check_branch
          %285 = sbr.rel (%p283) target = $region40
        $region39: #{tpu_custom_call.1} parent=31 // pred_region
          %s286 = sand.u32 %s22, 1
          %s287 = scalar_lea.sflag [#allocation10], %s286
          %s288 = sand.u32 %s85, 1
          %s289 = smul.addr %s288, 8
          %s290 = scalar_lea.vmem [#allocation9], %s289
          %p291 = scmp.lt.s32.totalorder %s31, %s30
          %s292 = scalar_select %p291, %s31, %s30
          %s294 = ssub.s32 128, 128
          %295 = vsyncadd %s287, %s294
          %s296 = sadd.s32 %s292, %s29
          %s297 = smul.addr %s296, 128
          %s298 = scalar_lea.hbm %s1, %s297
          %s300 = sshll.u32 %s290, 4
          %s301 = int_to_ptr.vmem [resolvable:$true] %s300
          %303 = dma.hbm_to_vmem [thread:$0]  %s298, 128, %s301, %s287
        $region40: #{tpu_custom_call.1} parent=31 // pred_fallthru
          _
      $region32: #{tpu_custom_call.1} parent=5 // pred_fallthru
        _
      %p304 = scmp.le.s32.totalorder 1, %s22
      %p305 = scmp.lt.s32.totalorder %s22, 3
      %p306 = pnand %p304, %p305
      %p307 = pneg %p306
      // Predicated region
      $region41: #{tpu_custom_call.1} parent=5 // pred_check
        _
      $region42: #{tpu_custom_call.1} parent=5 // pred_check_branch
        %309 = sbr.rel (%p306) target = $region44
      $region43: #{tpu_custom_call.1} parent=5 // pred_region
        %s310 = ssub.s32 %s22, 1
        %s311 = sand.u32 %s56, 1
        %s312 = scalar_lea.sflag [#allocation7], %s311
        %s313 = sand.u32 %s56, 1
        %s314 = smul.addr %s313, 8
        %s315 = scalar_lea.vmem [#allocation6], %s314
        // Predicated region
        $region45: #{tpu_custom_call.1} parent=43 // pred_check
          %p316 = pneg %p69
        $region46: #{tpu_custom_call.1} parent=43 // pred_check_branch
          %318 = sbr.rel (%p316) target = $region48
        $region47: #{tpu_custom_call.1} parent=43 // pred_region
          %319 = dma.done %s312, 128
        $region48: #{tpu_custom_call.1} parent=43 // pred_fallthru
          _
        %s320 = sand.u32 %s27, 1
        %s321 = scalar_lea.sflag [#allocation10], %s320
        %s322 = sand.u32 %s88, 1
        %s323 = smul.addr %s322, 8
        %s324 = scalar_lea.vmem [#allocation9], %s323
        // Predicated region
        $region49: #{tpu_custom_call.1} parent=43 // pred_check
          %p325 = pneg %p101
        $region50: #{tpu_custom_call.1} parent=43 // pred_check_branch
          %327 = sbr.rel (%p325) target = $region52
        $region51: #{tpu_custom_call.1} parent=43 // pred_region
          %328 = dma.done %s321, 128
        $region52: #{tpu_custom_call.1} parent=43 // pred_fallthru
          _
        // Predicated region
        $region53: #{tpu_custom_call.1} parent=43 // pred_check
          %p329 = pneg %p122
        $region54: #{tpu_custom_call.1} parent=43 // pred_check_branch
          %331 = sbr.rel (%p329) target = $region56
        $region55: #{tpu_custom_call.1} parent=43 // pred_region
          %332 = dma.done [#allocation10], 512
        $region56: #{tpu_custom_call.1} parent=43 // pred_fallthru
          _
        // Predicated region
        $region57: #{tpu_custom_call.1} parent=43 // pred_check
          %p333 = pneg %p164
        $region58: #{tpu_custom_call.1} parent=43 // pred_check_branch
          %335 = sbr.rel (%p333) target = $region60
        $region59: #{tpu_custom_call.1} parent=43 // pred_region
          %336 = dma.done [#allocation13], 512
        $region60: #{tpu_custom_call.1} parent=43 // pred_fallthru
          _
        %s337 = sand.u32 %s56, 1
        %s338 = scalar_lea.sflag [#allocation7], %s337
        %s339 = sand.u32 %s56, 1
        %s340 = smul.addr %s339, 8
        %s341 = scalar_lea.vmem [#allocation6], %s340
        %p342 = pneg %p69
        %p343 = pneg %p66
        %s344 = sand.u32 %s27, 1
        %s345 = scalar_lea.sflag [#allocation10], %s344
        %s346 = sand.u32 %s88, 1
        %s347 = smul.addr %s346, 8
        %s348 = scalar_lea.vmem [#allocation9], %s347
        %p349 = pneg %p101
        %p350 = pneg %p98
        %p351 = pneg %p122
        %p352 = pneg %p119
        %p353 = pneg %p143
        %p354 = pneg %p140
        %p355 = pneg %p164
        %p356 = pneg %p161
        %p357 = pneg %p185
        %p358 = pneg %p182
        %p359 = pneg %p213
        %p360 = pneg %p210
        %s361 = sand.u32 %s200, 1
        %s362 = scalar_lea.sflag [#allocation8], %s361
        %s363 = sand.u32 %s200, 1
        %s364 = smul.addr %s363, 8
        %s365 = scalar_lea.vmem [#allocation14], %s364
        %p366 = scmp.lt.s32.totalorder %s34, %s33
        %s367 = scalar_select %p366, %s34, %s33
        %p368 = scmp.eq.s32.totalorder %s34, 0
        // Predicated region
        $region61: #{tpu_custom_call.1} parent=43 // pred_check
          %p369 = pneg %p368
        $region62: #{tpu_custom_call.1} parent=43 // pred_check_branch
          %371 = sbr.rel (%p369) target = $region64
        $region63: #{tpu_custom_call.1} parent=43 // pred_region
          %v372 = vld [vmem:[%s315] sm:$0xff]
          %v373 = vld [vmem:[#allocation11] sm:$0xff]
          %v374 = vld [vmem:[#allocation11 + $0x8] sm:$0xff]
          %v375 = vld [vmem:[#allocation11 + $0x10] sm:$0xff]
          %v376 = vld [vmem:[#allocation11 + $0x18] sm:$0xff]
          %v377 = vld [vmem:[%s3] sm:$0x1]
          %v379 = vlaneseq
          %v380 = vshrl.u32 %v379, 7
          %v381 = vsub.s32 0, %v380
          %v382 = vrot.slane %v377, %v381
          %vm384 = vcmask 261120
          %v386 = vsel %vm384, %v372, 0
          %388 = vmatprep.subr.mxu0 0.0
          %389 = vmatpush1.msra.mxu0 %v373
          %390 = vmatprep.subr.mxu0 0.0
          %391 = vmatpush1.msra.mxu0 %v374
          %392 = vmatprep.subr.mxu0 0.0
          %393 = vmatpush1.msra.mxu0 %v375
          %394 = vmatprep.subr.mxu0 0.0
          %395 = vmatpush1.msra.mxu0 %v376
          %396 = vmatprep.subr.mxu0 0.0
          %397 = vmatpush1.msra.mxu0 0.0
          %398 = vmatprep.subr.mxu0 0.0
          %399 = vmatpush1.msra.mxu0 0.0
          %400 = vmatprep.subr.mxu0 0.0
          %401 = vmatpush1.msra.mxu0 0.0
          %402 = vmatprep.subr.mxu0 0.0
          %403 = vmatpush1.msra.mxu0 0.0
          %404 = vmatprep.subr.mxu0 0.0
          %405 = vmatpush1.msra.mxu0 0.0
          %406 = vmatprep.subr.mxu0 0.0
          %407 = vmatpush1.msra.mxu0 0.0
          %408 = vmatprep.subr.mxu0 0.0
          %409 = vmatpush1.msra.mxu0 0.0
          %410 = vmatprep.subr.mxu0 0.0
          %411 = vmatpush1.msra.mxu0 0.0
          %412 = vmatprep.subr.mxu0 0.0
          %413 = vmatpush1.msra.mxu0 0.0
          %414 = vmatprep.subr.mxu0 0.0
          %415 = vmatpush1.msra.mxu0 0.0
          %416 = vmatprep.subr.mxu0 0.0
          %417 = vmatpush1.msra.mxu0 0.0
          %418 = vmatprep.subr.mxu0 0.0
          %419 = vmatpush1.msra.mxu0 0.0
          %420 = vmatprep.subr.mxu0 0.0
          %421 = vmatpush1.msra.mxu0 0.0
          %422 = vmatprep.subr.mxu0 0.0
          %423 = vmatpush1.msra.mxu0 0.0
          %424 = vmatprep.subr.mxu0 0.0
          %425 = vmatpush1.msra.mxu0 0.0
          %426 = vmatprep.subr.mxu0 0.0
          %427 = vmatpush1.msra.mxu0 0.0
          %428 = vmatprep.subr.mxu0 0.0
          %429 = vmatpush1.msra.mxu0 0.0
          %430 = vmatprep.subr.mxu0 0.0
          %431 = vmatpush1.msra.mxu0 0.0
          %432 = vmatprep.subr.mxu0 0.0
          %433 = vmatpush1.msra.mxu0 0.0
          %434 = vmatprep.subr.mxu0 0.0
          %435 = vmatpush1.msra.mxu0 0.0
          %436 = vmatprep.subr.mxu0 0.0
          %437 = vmatpush1.msra.mxu0 0.0
          %438 = vmatprep.subr.mxu0 0.0
          %439 = vmatpush1.msra.mxu0 0.0
          %440 = vmatprep.subr.mxu0 0.0
          %441 = vmatpush1.msra.mxu0 0.0
          %442 = vmatprep.subr.mxu0 0.0
          %443 = vmatpush1.msra.mxu0 0.0
          %444 = vmatprep.subr.mxu0 0.0
          %445 = vmatpush1.msra.mxu0 0.0
          %446 = vmatprep.subr.mxu0 0.0
          %447 = vmatpush1.msra.mxu0 0.0
          %448 = vmatprep.subr.mxu0 0.0
          %449 = vmatpush1.msra.mxu0 0.0
          %450 = vmatprep.subr.mxu0 0.0
          %451 = vmatpush1.msra.mxu0 0.0
          %452 = vmatprep.mubr.f32.mxu0 0.0
          %453 = vmatmul.mubr.f32.gmra.mrb[0].mxu0 %v386
          %v454 = vpop.f32.mrb[0].mxu0
          %v455 = vadd.f32 %v382, %v454
          %v456 = vpop.f32.mrb[0].mxu0
          %457 = vdwg.mxu0
          %458 = vst.msk [vmem:[#allocation2] sm:$0xff] %vm384, %v455
          %vm459 = vcmask 7168
          %460 = vst.msk [vmem:[#allocation3] sm:$0xff] %vm459, -1e+30
          %461 = vst.msk [vmem:[#allocation3 + $0x8] sm:$0xff] %vm459, -1e+30
          %462 = vst.msk [vmem:[#allocation4] sm:$0xff] %vm459, 0.0
          %463 = vst.msk [vmem:[#allocation4 + $0x8] sm:$0xff] %vm459, 0.0
          %vm464 = vcmask 130048
          %465 = vst.msk [vmem:[#allocation5] sm:$0xff] %vm464, 0.0
          %466 = vst.msk [vmem:[#allocation5 + $0x8] sm:$0xff] %vm464, 0.0
        $region64: #{tpu_custom_call.1} parent=43 // pred_fallthru
          _
        %p467 = scmp.le.s32.totalorder %s34, %s33
        // Predicated region
        $region65: #{tpu_custom_call.1} parent=43 // pred_check
          %p468 = pneg %p467
        $region66: #{tpu_custom_call.1} parent=43 // pred_check_branch
          %470 = sbr.rel (%p468) target = $region68
        $region67: #{tpu_custom_call.1} parent=43 // pred_region
          %v471 = vld [vmem:[%s324] sm:$0xff]
          %v472 = vld [vmem:[#allocation12] sm:$0xff]
          %v473 = vld [vmem:[#allocation12 + $0x8] sm:$0xff]
          %v474 = vld [vmem:[#allocation12 + $0x10] sm:$0xff]
          %v475 = vld [vmem:[#allocation12 + $0x18] sm:$0xff]
          %v476 = vld [vmem:[%s5] sm:$0x1]
          %v478 = vlaneseq
          %v479 = vshrl.u32 %v478, 7
          %v480 = vsub.s32 0, %v479
          %v481 = vrot.slane %v476, %v480
          %vm483 = vcmask 261120
          %v485 = vsel %vm483, %v471, 0
          %487 = vmatprep.subr.mxu0 0.0
          %488 = vmatpush1.msra.mxu0 %v472
          %489 = vmatprep.subr.mxu0 0.0
          %490 = vmatpush1.msra.mxu0 %v473
          %491 = vmatprep.subr.mxu0 0.0
          %492 = vmatpush1.msra.mxu0 %v474
          %493 = vmatprep.subr.mxu0 0.0
          %494 = vmatpush1.msra.mxu0 %v475
          %495 = vmatprep.subr.mxu0 0.0
          %496 = vmatpush1.msra.mxu0 0.0
          %497 = vmatprep.subr.mxu0 0.0
          %498 = vmatpush1.msra.mxu0 0.0
          %499 = vmatprep.subr.mxu0 0.0
          %500 = vmatpush1.msra.mxu0 0.0
          %501 = vmatprep.subr.mxu0 0.0
          %502 = vmatpush1.msra.mxu0 0.0
          %503 = vmatprep.subr.mxu0 0.0
          %504 = vmatpush1.msra.mxu0 0.0
          %505 = vmatprep.subr.mxu0 0.0
          %506 = vmatpush1.msra.mxu0 0.0
          %507 = vmatprep.subr.mxu0 0.0
          %508 = vmatpush1.msra.mxu0 0.0
          %509 = vmatprep.subr.mxu0 0.0
          %510 = vmatpush1.msra.mxu0 0.0
          %511 = vmatprep.subr.mxu0 0.0
          %512 = vmatpush1.msra.mxu0 0.0
          %513 = vmatprep.subr.mxu0 0.0
          %514 = vmatpush1.msra.mxu0 0.0
          %515 = vmatprep.subr.mxu0 0.0
          %516 = vmatpush1.msra.mxu0 0.0
          %517 = vmatprep.subr.mxu0 0.0
          %518 = vmatpush1.msra.mxu0 0.0
          %519 = vmatprep.subr.mxu0 0.0
          %520 = vmatpush1.msra.mxu0 0.0
          %521 = vmatprep.subr.mxu0 0.0
          %522 = vmatpush1.msra.mxu0 0.0
          %523 = vmatprep.subr.mxu0 0.0
          %524 = vmatpush1.msra.mxu0 0.0
          %525 = vmatprep.subr.mxu0 0.0
          %526 = vmatpush1.msra.mxu0 0.0
          %527 = vmatprep.subr.mxu0 0.0
          %528 = vmatpush1.msra.mxu0 0.0
          %529 = vmatprep.subr.mxu0 0.0
          %530 = vmatpush1.msra.mxu0 0.0
          %531 = vmatprep.subr.mxu0 0.0
          %532 = vmatpush1.msra.mxu0 0.0
          %533 = vmatprep.subr.mxu0 0.0
          %534 = vmatpush1.msra.mxu0 0.0
          %535 = vmatprep.subr.mxu0 0.0
          %536 = vmatpush1.msra.mxu0 0.0
          %537 = vmatprep.subr.mxu0 0.0
          %538 = vmatpush1.msra.mxu0 0.0
          %539 = vmatprep.subr.mxu0 0.0
          %540 = vmatpush1.msra.mxu0 0.0
          %541 = vmatprep.subr.mxu0 0.0
          %542 = vmatpush1.msra.mxu0 0.0
          %543 = vmatprep.subr.mxu0 0.0
          %544 = vmatpush1.msra.mxu0 0.0
          %545 = vmatprep.subr.mxu0 0.0
          %546 = vmatpush1.msra.mxu0 0.0
          %547 = vmatprep.subr.mxu0 0.0
          %548 = vmatpush1.msra.mxu0 0.0
          %549 = vmatprep.subr.mxu0 0.0
          %550 = vmatpush1.msra.mxu0 0.0
          %551 = vmatprep.mubr.f32.mxu0 0.0
          %552 = vmatmul.mubr.f32.gmra.mrb[0].mxu0 %v485
          %v553 = vpop.f32.mrb[0].mxu0
          %v554 = vadd.f32 %v481, %v553
          %v555 = vpop.f32.mrb[0].mxu0
          %556 = vdwg.mxu0
          %s557 = smul.u32 %s33, 8
          %v558 = vlaneseq
          %v559 = vshrl.u32 %v558, 7
          %v560 = vstv %s557
          %v561 = vadd.s32 %v560, %v559
          %s562 = smul.u32 %s34, 8
          %v563 = vlaneseq
          %v564 = vand.u32 %v563, 127
          %v565 = vstv %s562
          %v566 = vadd.s32 %v565, %v564
          %vm567 = vcmp.ge.s32.totalorder %v561, %v566
          %v568 = vsel %vm567, 0.0, -1e+30
          %v569 = vld [vmem:[#allocation2] sm:$0xff]
          %vm570 = vcmask 130048
          %v572 = vsel %vm570, %v569, 0
          %v575 = vsel %vm570, %v554, 0
          %577 = vmatprep.subr.mxu0 0.0
          %578 = vmatpush1.xpose.msra.mxu0 %v575
          %579 = vmatprep.subr.mxu0 0.0
          %580 = vmatpush1.xpose.msra.mxu0 0.0
          %581 = vmatprep.subr.mxu0 0.0
          %582 = vmatpush1.xpose.msra.mxu0 0.0
          %583 = vmatprep.subr.mxu0 0.0
          %584 = vmatpush1.xpose.msra.mxu0 0.0
          %585 = vmatprep.subr.mxu0 0.0
          %586 = vmatpush1.xpose.msra.mxu0 0.0
          %587 = vmatprep.subr.mxu0 0.0
          %588 = vmatpush1.xpose.msra.mxu0 0.0
          %589 = vmatprep.subr.mxu0 0.0
          %590 = vmatpush1.xpose.msra.mxu0 0.0
          %591 = vmatprep.subr.mxu0 0.0
          %592 = vmatpush1.xpose.msra.mxu0 0.0
          %593 = vmatprep.subr.mxu0 0.0
          %594 = vmatpush1.xpose.msra.mxu0 0.0
          %595 = vmatprep.subr.mxu0 0.0
          %596 = vmatpush1.xpose.msra.mxu0 0.0
          %597 = vmatprep.subr.mxu0 0.0
          %598 = vmatpush1.xpose.msra.mxu0 0.0
          %599 = vmatprep.subr.mxu0 0.0
          %600 = vmatpush1.xpose.msra.mxu0 0.0
          %601 = vmatprep.subr.mxu0 0.0
          %602 = vmatpush1.xpose.msra.mxu0 0.0
          %603 = vmatprep.subr.mxu0 0.0
          %604 = vmatpush1.xpose.msra.mxu0 0.0
          %605 = vmatprep.subr.mxu0 0.0
          %606 = vmatpush1.xpose.msra.mxu0 0.0
          %607 = vmatprep.subr.mxu0 0.0
          %608 = vmatpush1.xpose.msra.mxu0 0.0
          %609 = vmatprep.subr.mxu0 0.0
          %610 = vmatpush1.xpose.msra.mxu0 0.0
          %611 = vmatprep.subr.mxu0 0.0
          %612 = vmatpush1.xpose.msra.mxu0 0.0
          %613 = vmatprep.subr.mxu0 0.0
          %614 = vmatpush1.xpose.msra.mxu0 0.0
          %615 = vmatprep.subr.mxu0 0.0
          %616 = vmatpush1.xpose.msra.mxu0 0.0
          %617 = vmatprep.subr.mxu0 0.0
          %618 = vmatpush1.xpose.msra.mxu0 0.0
          %619 = vmatprep.subr.mxu0 0.0
          %620 = vmatpush1.xpose.msra.mxu0 0.0
          %621 = vmatprep.subr.mxu0 0.0
          %622 = vmatpush1.xpose.msra.mxu0 0.0
          %623 = vmatprep.subr.mxu0 0.0
          %624 = vmatpush1.xpose.msra.mxu0 0.0
          %625 = vmatprep.subr.mxu0 0.0
          %626 = vmatpush1.xpose.msra.mxu0 0.0
          %627 = vmatprep.subr.mxu0 0.0
          %628 = vmatpush1.xpose.msra.mxu0 0.0
          %629 = vmatprep.subr.mxu0 0.0
          %630 = vmatpush1.xpose.msra.mxu0 0.0
          %631 = vmatprep.subr.mxu0 0.0
          %632 = vmatpush1.xpose.msra.mxu0 0.0
          %633 = vmatprep.subr.mxu0 0.0
          %634 = vmatpush1.xpose.msra.mxu0 0.0
          %635 = vmatprep.subr.mxu0 0.0
          %636 = vmatpush1.xpose.msra.mxu0 0.0
          %637 = vmatprep.subr.mxu0 0.0
          %638 = vmatpush1.xpose.msra.mxu0 0.0
          %639 = vmatprep.subr.mxu0 0.0
          %640 = vmatpush1.xpose.msra.mxu0 0.0
          %641 = vmatprep.mubr.f32.mxu0 0.0
          %642 = vmatmul.mubr.f32.gmra.mrb[0].mxu0 %v572
          %v643 = vpop.f32.mrb[0].mxu0
          %v644 = vadd.f32 %v568, %v643
          %v645 = vpop.f32.mrb[0].mxu0
          %646 = vdwg.mxu0
          %v647 = vld [vmem:[#allocation3] sm:$0xff]
          %vm648 = vcmask 64512
          %v649 = vsel %vm648, %v644, -inf
          %650 = vmax.xlane.f32.xlu0 %v649
          %v651 = vpop.xlane.xlu0 %650
          %v652 = vmax.f32 %v647, %v651
          %v653 = vsub.f32 %v647, %v652
          %v654 = vmul.f32 %v653, 1.442695
          %v655 = vpow.pop %v654
          %657 = vset.pattern.permute.xlu0 0
          %658 = vperm.xlu0 %657, %v652
          %v659 = vpop.permute.xlu0 %658
          %v661 = vsub.f32 %v644, %v659
          %v662 = vmul.f32 %v661, 1.442695
          %v663 = vpow.pop %v662
          %v664 = vld [vmem:[#allocation4] sm:$0xff]
          %v665 = vmul.f32 %v655, %v664
          %v666 = vsel %vm648, %v663, 0.0
          %667 = vadd.xlane.f32.xlu0 %v666
          %v668 = vpop.xlane.xlu0 %667
          %v669 = vadd.f32 %v665, %v668
          %vm670 = vcmask 7168
          %671 = vst.msk [vmem:[#allocation4] sm:$0xff] %vm670, %v669
          %v672 = vld [vmem:[#allocation5] sm:$0xff]
          %674 = vset.pattern.permute.xlu0 0
          %675 = vperm.xlu0 %674, %v655
          %v676 = vpop.permute.xlu0 %675
          %v678 = vmul.f32 %v676, %v672
          %679 = vrot.lane.b32.xlu0 %v554, 96
          %v680 = vpop.permute.xlu0 %679
          %v683 = vsel %vm648, %v663, 0
          %685 = vmatprep.subr.mxu0 0.0
          %686 = vmatpush1.msra.mxu0 %v680
          %687 = vmatprep.subr.mxu0 0.0
          %688 = vmatpush1.msra.mxu0 0.0
          %689 = vmatprep.subr.mxu0 0.0
          %690 = vmatpush1.msra.mxu0 0.0
          %691 = vmatprep.subr.mxu0 0.0
          %692 = vmatpush1.msra.mxu0 0.0
          %693 = vmatprep.subr.mxu0 0.0
          %694 = vmatpush1.msra.mxu0 0.0
          %695 = vmatprep.subr.mxu0 0.0
          %696 = vmatpush1.msra.mxu0 0.0
          %697 = vmatprep.subr.mxu0 0.0
          %698 = vmatpush1.msra.mxu0 0.0
          %699 = vmatprep.subr.mxu0 0.0
          %700 = vmatpush1.msra.mxu0 0.0
          %701 = vmatprep.subr.mxu0 0.0
          %702 = vmatpush1.msra.mxu0 0.0
          %703 = vmatprep.subr.mxu0 0.0
          %704 = vmatpush1.msra.mxu0 0.0
          %705 = vmatprep.subr.mxu0 0.0
          %706 = vmatpush1.msra.mxu0 0.0
          %707 = vmatprep.subr.mxu0 0.0
          %708 = vmatpush1.msra.mxu0 0.0
          %709 = vmatprep.subr.mxu0 0.0
          %710 = vmatpush1.msra.mxu0 0.0
          %711 = vmatprep.subr.mxu0 0.0
          %712 = vmatpush1.msra.mxu0 0.0
          %713 = vmatprep.subr.mxu0 0.0
          %714 = vmatpush1.msra.mxu0 0.0
          %715 = vmatprep.subr.mxu0 0.0
          %716 = vmatpush1.msra.mxu0 0.0
          %717 = vmatprep.subr.mxu0 0.0
          %718 = vmatpush1.msra.mxu0 0.0
          %719 = vmatprep.subr.mxu0 0.0
          %720 = vmatpush1.msra.mxu0 0.0
          %721 = vmatprep.subr.mxu0 0.0
          %722 = vmatpush1.msra.mxu0 0.0
          %723 = vmatprep.subr.mxu0 0.0
          %724 = vmatpush1.msra.mxu0 0.0
          %725 = vmatprep.subr.mxu0 0.0
          %726 = vmatpush1.msra.mxu0 0.0
          %727 = vmatprep.subr.mxu0 0.0
          %728 = vmatpush1.msra.mxu0 0.0
          %729 = vmatprep.subr.mxu0 0.0
          %730 = vmatpush1.msra.mxu0 0.0
          %731 = vmatprep.subr.mxu0 0.0
          %732 = vmatpush1.msra.mxu0 0.0
          %733 = vmatprep.subr.mxu0 0.0
          %734 = vmatpush1.msra.mxu0 0.0
          %735 = vmatprep.subr.mxu0 0.0
          %736 = vmatpush1.msra.mxu0 0.0
          %737 = vmatprep.subr.mxu0 0.0
          %738 = vmatpush1.msra.mxu0 0.0
          %739 = vmatprep.subr.mxu0 0.0
          %740 = vmatpush1.msra.mxu0 0.0
          %741 = vmatprep.subr.mxu0 0.0
          %742 = vmatpush1.msra.mxu0 0.0
          %743 = vmatprep.subr.mxu0 0.0
          %744 = vmatpush1.msra.mxu0 0.0
          %745 = vmatprep.subr.mxu0 0.0
          %746 = vmatpush1.msra.mxu0 0.0
          %747 = vmatprep.subr.mxu0 0.0
          %748 = vmatpush1.msra.mxu0 0.0
          %749 = vmatprep.mubr.f32.mxu0 0.0
          %750 = vmatmul.mubr.f32.gmra.mrb[0].mxu0 %v683
          %v751 = vpop.f32.mrb[0].mxu0
          %v752 = vadd.f32 0.0, %v751
          %v753 = vpop.f32.mrb[0].mxu0
          %754 = vdwg.mxu0
          %v755 = vadd.f32 %v678, %v752
          %756 = vst.msk [vmem:[#allocation5] sm:$0xff] %vm570, %v755
          %757 = vst.msk [vmem:[#allocation3] sm:$0xff] %vm670, %v652
          %v758 = vld [vmem:[#allocation2] sm:$0xff]
          %760 = vrot.lane.b32.xlu0 %v758, 112
          %v761 = vpop.permute.xlu0 %760
          %762 = vrot.lane.b32.xlu0 %v554, 112
          %v763 = vpop.permute.xlu0 %762
          %v764 = vsel %vm570, %v761, 0
          %v766 = vsel %vm570, %v763, 0
          %768 = vmatprep.subr.mxu0 0.0
          %769 = vmatpush1.xpose.msra.mxu0 %v766
          %770 = vmatprep.subr.mxu0 0.0
          %771 = vmatpush1.xpose.msra.mxu0 0.0
          %772 = vmatprep.subr.mxu0 0.0
          %773 = vmatpush1.xpose.msra.mxu0 0.0
          %774 = vmatprep.subr.mxu0 0.0
          %775 = vmatpush1.xpose.msra.mxu0 0.0
          %776 = vmatprep.subr.mxu0 0.0
          %777 = vmatpush1.xpose.msra.mxu0 0.0
          %778 = vmatprep.subr.mxu0 0.0
          %779 = vmatpush1.xpose.msra.mxu0 0.0
          %780 = vmatprep.subr.mxu0 0.0
          %781 = vmatpush1.xpose.msra.mxu0 0.0
          %782 = vmatprep.subr.mxu0 0.0
          %783 = vmatpush1.xpose.msra.mxu0 0.0
          %784 = vmatprep.subr.mxu0 0.0
          %785 = vmatpush1.xpose.msra.mxu0 0.0
          %786 = vmatprep.subr.mxu0 0.0
          %787 = vmatpush1.xpose.msra.mxu0 0.0
          %788 = vmatprep.subr.mxu0 0.0
          %789 = vmatpush1.xpose.msra.mxu0 0.0
          %790 = vmatprep.subr.mxu0 0.0
          %791 = vmatpush1.xpose.msra.mxu0 0.0
          %792 = vmatprep.subr.mxu0 0.0
          %793 = vmatpush1.xpose.msra.mxu0 0.0
          %794 = vmatprep.subr.mxu0 0.0
          %795 = vmatpush1.xpose.msra.mxu0 0.0
          %796 = vmatprep.subr.mxu0 0.0
          %797 = vmatpush1.xpose.msra.mxu0 0.0
          %798 = vmatprep.subr.mxu0 0.0
          %799 = vmatpush1.xpose.msra.mxu0 0.0
          %800 = vmatprep.subr.mxu0 0.0
          %801 = vmatpush1.xpose.msra.mxu0 0.0
          %802 = vmatprep.subr.mxu0 0.0
          %803 = vmatpush1.xpose.msra.mxu0 0.0
          %804 = vmatprep.subr.mxu0 0.0
          %805 = vmatpush1.xpose.msra.mxu0 0.0
          %806 = vmatprep.subr.mxu0 0.0
          %807 = vmatpush1.xpose.msra.mxu0 0.0
          %808 = vmatprep.subr.mxu0 0.0
          %809 = vmatpush1.xpose.msra.mxu0 0.0
          %810 = vmatprep.subr.mxu0 0.0
          %811 = vmatpush1.xpose.msra.mxu0 0.0
          %812 = vmatprep.subr.mxu0 0.0
          %813 = vmatpush1.xpose.msra.mxu0 0.0
          %814 = vmatprep.subr.mxu0 0.0
          %815 = vmatpush1.xpose.msra.mxu0 0.0
          %816 = vmatprep.subr.mxu0 0.0
          %817 = vmatpush1.xpose.msra.mxu0 0.0
          %818 = vmatprep.subr.mxu0 0.0
          %819 = vmatpush1.xpose.msra.mxu0 0.0
          %820 = vmatprep.subr.mxu0 0.0
          %821 = vmatpush1.xpose.msra.mxu0 0.0
          %822 = vmatprep.subr.mxu0 0.0
          %823 = vmatpush1.xpose.msra.mxu0 0.0
          %824 = vmatprep.subr.mxu0 0.0
          %825 = vmatpush1.xpose.msra.mxu0 0.0
          %826 = vmatprep.subr.mxu0 0.0
          %827 = vmatpush1.xpose.msra.mxu0 0.0
          %828 = vmatprep.subr.mxu0 0.0
          %829 = vmatpush1.xpose.msra.mxu0 0.0
          %830 = vmatprep.subr.mxu0 0.0
          %831 = vmatpush1.xpose.msra.mxu0 0.0
          %832 = vmatprep.mubr.f32.mxu0 0.0
          %833 = vmatmul.mubr.f32.gmra.mrb[0].mxu0 %v764
          %v834 = vpop.f32.mrb[0].mxu0
          %v835 = vadd.f32 %v568, %v834
          %v836 = vpop.f32.mrb[0].mxu0
          %837 = vdwg.mxu0
          %s838 = scalar_lea.vmem [#allocation3], 8
          %v839 = vld [vmem:[%s838] sm:$0xff]
          %v840 = vsel %vm648, %v835, -inf
          %841 = vmax.xlane.f32.xlu0 %v840
          %v842 = vpop.xlane.xlu0 %841
          %v843 = vmax.f32 %v839, %v842
          %v844 = vsub.f32 %v839, %v843
          %v845 = vmul.f32 %v844, 1.442695
          %v846 = vpow.pop %v845
          %848 = vset.pattern.permute.xlu0 0
          %849 = vperm.xlu0 %848, %v843
          %v850 = vpop.permute.xlu0 %849
          %v852 = vsub.f32 %v835, %v850
          %v853 = vmul.f32 %v852, 1.442695
          %v854 = vpow.pop %v853
          %s855 = scalar_lea.vmem [#allocation4], 8
          %v856 = vld [vmem:[%s855] sm:$0xff]
          %v857 = vmul.f32 %v846, %v856
          %v858 = vsel %vm648, %v854, 0.0
          %859 = vadd.xlane.f32.xlu0 %v858
          %v860 = vpop.xlane.xlu0 %859
          %v861 = vadd.f32 %v857, %v860
          %862 = vst.msk [vmem:[%s855] sm:$0xff] %vm670, %v861
          %s863 = scalar_lea.vmem [#allocation5], 8
          %v864 = vld [vmem:[%s863] sm:$0xff]
          %866 = vset.pattern.permute.xlu0 0
          %867 = vperm.xlu0 %866, %v846
          %v868 = vpop.permute.xlu0 %867
          %v870 = vmul.f32 %v868, %v864
          %871 = vrot.lane.b32.xlu0 %v554, 80
          %v872 = vpop.permute.xlu0 %871
          %v875 = vsel %vm648, %v854, 0
          %877 = vmatprep.subr.mxu0 0.0
          %878 = vmatpush1.msra.mxu0 %v872
          %879 = vmatprep.subr.mxu0 0.0
          %880 = vmatpush1.msra.mxu0 0.0
          %881 = vmatprep.subr.mxu0 0.0
          %882 = vmatpush1.msra.mxu0 0.0
          %883 = vmatprep.subr.mxu0 0.0
          %884 = vmatpush1.msra.mxu0 0.0
          %885 = vmatprep.subr.mxu0 0.0
          %886 = vmatpush1.msra.mxu0 0.0
          %887 = vmatprep.subr.mxu0 0.0
          %888 = vmatpush1.msra.mxu0 0.0
          %889 = vmatprep.subr.mxu0 0.0
          %890 = vmatpush1.msra.mxu0 0.0
          %891 = vmatprep.subr.mxu0 0.0
          %892 = vmatpush1.msra.mxu0 0.0
          %893 = vmatprep.subr.mxu0 0.0
          %894 = vmatpush1.msra.mxu0 0.0
          %895 = vmatprep.subr.mxu0 0.0
          %896 = vmatpush1.msra.mxu0 0.0
          %897 = vmatprep.subr.mxu0 0.0
          %898 = vmatpush1.msra.mxu0 0.0
          %899 = vmatprep.subr.mxu0 0.0
          %900 = vmatpush1.msra.mxu0 0.0
          %901 = vmatprep.subr.mxu0 0.0
          %902 = vmatpush1.msra.mxu0 0.0
          %903 = vmatprep.subr.mxu0 0.0
          %904 = vmatpush1.msra.mxu0 0.0
          %905 = vmatprep.subr.mxu0 0.0
          %906 = vmatpush1.msra.mxu0 0.0
          %907 = vmatprep.subr.mxu0 0.0
          %908 = vmatpush1.msra.mxu0 0.0
          %909 = vmatprep.subr.mxu0 0.0
          %910 = vmatpush1.msra.mxu0 0.0
          %911 = vmatprep.subr.mxu0 0.0
          %912 = vmatpush1.msra.mxu0 0.0
          %913 = vmatprep.subr.mxu0 0.0
          %914 = vmatpush1.msra.mxu0 0.0
          %915 = vmatprep.subr.mxu0 0.0
          %916 = vmatpush1.msra.mxu0 0.0
          %917 = vmatprep.subr.mxu0 0.0
          %918 = vmatpush1.msra.mxu0 0.0
          %919 = vmatprep.subr.mxu0 0.0
          %920 = vmatpush1.msra.mxu0 0.0
          %921 = vmatprep.subr.mxu0 0.0
          %922 = vmatpush1.msra.mxu0 0.0
          %923 = vmatprep.subr.mxu0 0.0
          %924 = vmatpush1.msra.mxu0 0.0
          %925 = vmatprep.subr.mxu0 0.0
          %926 = vmatpush1.msra.mxu0 0.0
          %927 = vmatprep.subr.mxu0 0.0
          %928 = vmatpush1.msra.mxu0 0.0
          %929 = vmatprep.subr.mxu0 0.0
          %930 = vmatpush1.msra.mxu0 0.0
          %931 = vmatprep.subr.mxu0 0.0
          %932 = vmatpush1.msra.mxu0 0.0
          %933 = vmatprep.subr.mxu0 0.0
          %934 = vmatpush1.msra.mxu0 0.0
          %935 = vmatprep.subr.mxu0 0.0
          %936 = vmatpush1.msra.mxu0 0.0
          %937 = vmatprep.subr.mxu0 0.0
          %938 = vmatpush1.msra.mxu0 0.0
          %939 = vmatprep.subr.mxu0 0.0
          %940 = vmatpush1.msra.mxu0 0.0
          %941 = vmatprep.mubr.f32.mxu0 0.0
          %942 = vmatmul.mubr.f32.gmra.mrb[0].mxu0 %v875
          %v943 = vpop.f32.mrb[0].mxu0
          %v944 = vadd.f32 0.0, %v943
          %v945 = vpop.f32.mrb[0].mxu0
          %946 = vdwg.mxu0
          %v947 = vadd.f32 %v870, %v944
          %948 = vst.msk [vmem:[%s863] sm:$0xff] %vm570, %v947
          %949 = vst.msk [vmem:[%s838] sm:$0xff] %vm670, %v843
        $region68: #{tpu_custom_call.1} parent=43 // pred_fallthru
          _
        %p950 = scmp.eq.s32.totalorder %s34, %s33
        // Predicated region
        $region69: #{tpu_custom_call.1} parent=43 // pred_check
          %p951 = pneg %p950
        $region70: #{tpu_custom_call.1} parent=43 // pred_check_branch
          %953 = sbr.rel (%p951) target = $region72
        $region71: #{tpu_custom_call.1} parent=43 // pred_region
          %v954 = vld [vmem:[#allocation4] sm:$0xff]
          %v955 = vld [vmem:[#allocation4 + $0x8] sm:$0xff]
          %v956 = vrcp.pop %v954
          %v957 = vrcp.pop %v955
          %v958 = vld [vmem:[#allocation5] sm:$0xff]
          %960 = vset.pattern.permute.xlu0 0
          %961 = vperm.xlu0 %960, %v956
          %v962 = vpop.permute.xlu0 %961
          %v964 = vmul.f32 %v958, %v962
          %s965 = scalar_lea.vmem [#allocation5], 8
          %v966 = vld [vmem:[%s965] sm:$0xff]
          %968 = vset.pattern.permute.xlu0 0
          %969 = vperm.xlu0 %968, %v957
          %v970 = vpop.permute.xlu0 %969
          %v972 = vmul.f32 %v966, %v970
          %974 = vrot.lane.b32.xlu0 %v972, 16
          %v975 = vpop.permute.xlu0 %974
          %vm977 = vcmask 130048
          %v978 = vsel %vm977, %v964, %v975
          %vm979 = vcmask 261120
          %980 = vst.msk [vmem:[%s365] sm:$0xff] %vm979, %v978
        $region72: #{tpu_custom_call.1} parent=43 // pred_fallthru
          _
        %s981 = sand.u32 %s200, 1
        %s982 = scalar_lea.sflag [#allocation8], %s981
        %s983 = sand.u32 %s200, 1
        %s984 = smul.addr %s983, 8
        %s985 = scalar_lea.vmem [#allocation14], %s984
        // Predicated region
        $region73: #{tpu_custom_call.1} parent=43 // pred_check
          %p986 = pneg %p210
        $region74: #{tpu_custom_call.1} parent=43 // pred_check_branch
          %988 = sbr.rel (%p986) target = $region76
        $region75: #{tpu_custom_call.1} parent=43 // pred_region
          %s990 = ssub.s32 128, 128
          %991 = vsyncadd %s982, %s990
          %s992 = sadd.s32 %s33, %s32
          %s993 = smul.addr %s992, 128
          %s994 = scalar_lea.hbm %s6, %s993
          %s996 = sshll.u32 %s985, 4
          %s997 = int_to_ptr.vmem [resolvable:$true] %s996
          %999 = dma.vmem_to_hbm [thread:$0]  %s997, 128, %s994, %s982
        $region76: #{tpu_custom_call.1} parent=43 // pred_fallthru
          _
      $region44: #{tpu_custom_call.1} parent=5 // pred_fallthru
        _
      %p1000 = scmp.le.s32.totalorder 2, %s22
      // Predicated region
      $region77: #{tpu_custom_call.1} parent=5 // pred_check
        %p1001 = pneg %p1000
      $region78: #{tpu_custom_call.1} parent=5 // pred_check_branch
        %1003 = sbr.rel (%p1001) target = $region80
      $region79: #{tpu_custom_call.1} parent=5 // pred_region
        %s1004 = ssub.s32 %s22, 2
        // Predicated region
        $region81: #{tpu_custom_call.1} parent=79 // pred_check
          %p1005 = pneg %p216
        $region82: #{tpu_custom_call.1} parent=79 // pred_check_branch
          %1007 = sbr.rel (%p1005) target = $region84
        $region83: #{tpu_custom_call.1} parent=79 // pred_region
          %s1008 = sand.u32 %s201, 1
          %s1009 = scalar_lea.sflag [#allocation8], %s1008
          %s1010 = sand.u32 %s201, 1
          %s1011 = smul.addr %s1010, 8
          %s1012 = scalar_lea.vmem [#allocation14], %s1011
          %1013 = dma.done %s1009, 128
        $region84: #{tpu_custom_call.1} parent=79 // pred_fallthru
          _
      $region80: #{tpu_custom_call.1} parent=5 // pred_fallthru
        _
    $region6: #{tpu_custom_call.1} parent=1 // loop_footer
      %s26 = sadd.s32 1, %s22
    $region7: #{tpu_custom_call.1} parent=1 // loop_footer_branch
      %21 = sbr.rel target = $region3
    $region8: #{tpu_custom_call.1} parent=1 // loop_exit
      _
    %1014 = vsyncpa [#allocation7], 1
    %s1015 = scalar_lea.sflag [#allocation7], 1
    %1016 = vsyncpa %s1015, 1
    %1017 = vsyncpa [#allocation10], 1
    %s1018 = scalar_lea.sflag [#allocation10], 1
    %1019 = vsyncpa %s1018, 1
    %1020 = vsyncpa [#allocation13], 1
    %1021 = vsyncpa [#allocation8], 1
    %s1022 = scalar_lea.sflag [#allocation8], 1
    %1023 = vsyncpa %s1022, 1

</llo_original>
